<compile_context>
chip_gen: v7x
topology: tpu7x:2x2x1
jax: 0.10.0
libtpu: 0.0.40
codegen_flags: <defaults>
</compile_context>

<pallas_src>
import functools

import numpy as np
import jax
import jax.numpy as jnp
from jax.experimental import pallas as pl
from jax.experimental.pallas import tpu as pltpu

N_ANTENNA = 64
N_BEAM = 8  # len(azimuths)


# ----------------------------------------------------------------------------
# Host-side constant construction (matches DFT_beam() in the reference codebase).
# ----------------------------------------------------------------------------
def _dft_codebook(n_antenna, azimuths):
    codebook = np.zeros((len(azimuths), n_antenna), dtype=np.complex128)
    for i, phi in enumerate(azimuths):
        arr_response = np.exp(1j * np.pi * np.arange(n_antenna) * np.sin(phi))
        codebook[i, :] = arr_response / np.sqrt(n_antenna)
    return codebook


def _combined_weight(codebook_real, codebook_imag):
    """W (2*Na, 2*Nb) such that [xr | xi] @ W = [bf_real | bf_imag]."""
    wr = np.asarray(codebook_real, np.float32).T   # (Na, Nb)
    wi = np.asarray(codebook_imag, np.float32).T   # (Na, Nb)
    w = np.block([[wr, wi], [-wi, wr]])            # (2*Na, 2*Nb)
    return jnp.asarray(w, jnp.float32)


def _power_selector(n_beam):
    """S (2*Nb, Nb) with gain = (y*y) @ S  (pairs real/imag lanes via the MXU)."""
    eye = np.eye(n_beam, dtype=np.float32)
    return jnp.asarray(np.concatenate([eye, eye], axis=0))


def _fast_reciprocal(s):
    """EUP approx reciprocal + one Newton refinement (~full f32 precision)."""
    r = pl.reciprocal(s, approx=True)
    return r * (2.0 - s * r)


# ----------------------------------------------------------------------------
# Kernels
# ----------------------------------------------------------------------------
def _leaf_kernel_small(x_ref, w_ref, s_ref, o_ref):
    """Grid-less path: everything VMEM-resident, normalization fused in."""
    y = jnp.dot(x_ref[...], w_ref[...], preferred_element_type=jnp.float32)
    gain = jnp.dot(y * y, s_ref[...], preferred_element_type=jnp.float32)
    total = jnp.sum(gain, keepdims=True)                    # (1, 1)
    o_ref[...] = gain * _fast_reciprocal(total)


def _leaf_gain_kernel(x_ref, w_ref, s_ref, gain_ref, *, batch, tile_b):
    """Per-tile un-normalized beam gains; ragged last tile masked to zero."""
    y = jnp.dot(x_ref[...], w_ref[...], preferred_element_type=jnp.float32)
    gain = jnp.dot(y * y, s_ref[...], preferred_element_type=jnp.float32)
    if batch % tile_b != 0:                                  # trace-time branch
        row = (pl.program_id(0) * tile_b
               + jax.lax.broadcasted_iota(jnp.int32, gain.shape, 0))
        gain = jnp.where(row < batch, gain, 0.0)
    gain_ref[...] = gain


def _leaf_sum_kernel(gain_ref, total_ref):
    """Accumulate the global scalar sum over gain tiles (resident (1,1) output)."""
    @pl.when(pl.program_id(0) == 0)
    def _():
        total_ref[...] = jnp.zeros_like(total_ref)

    total_ref[...] += jnp.sum(gain_ref[...], keepdims=True)


def _leaf_normalize_kernel(total_ref, gain_ref, o_ref):
    """Per-tile normalization by the global sum."""
    o_ref[...] = gain_ref[...] * _fast_reciprocal(total_ref[...])


# ----------------------------------------------------------------------------
# Wrapper
# ----------------------------------------------------------------------------
def leaf_forward(x, codebook_real, codebook_imag, *, tile_b=8192,
                 small_batch_max=8192):
    """x: (B, 2*n_antenna) f32; codebooks: (n_beam, n_antenna) f32 -> (B, n_beam)."""
    batch, two_na = x.shape
    n_beam = codebook_real.shape[0]
    w = _combined_weight(codebook_real, codebook_imag)   # (2*Na, 2*Nb)
    s = _power_selector(n_beam)                          # (2*Nb, Nb)
    x = x.astype(jnp.float32)

    if batch <= small_batch_max:
        # Single grid-less pass: one DMA per operand, no grid machinery.
        return pl.pallas_call(
            _leaf_kernel_small,
            out_shape=jax.ShapeDtypeStruct((batch, n_beam), jnp.float32),
            in_specs=[pl.BlockSpec(memory_space=pltpu.MemorySpace.VMEM)] * 3,
            out_specs=pl.BlockSpec(memory_space=pltpu.MemorySpace.VMEM),
        )(x, w, s)

    # ---------------- batch-tiled path ----------------
    tile_b = max(8, (tile_b // 8) * 8)                   # sublane-aligned tile
    n_tiles = pl.cdiv(batch, tile_b)
    padded = n_tiles * tile_b                            # gains intermediate is padded
    cp_parallel = pltpu.CompilerParams(
        dimension_semantics=("parallel",), vmem_limit_bytes=32 * 1024 * 1024)
    cp_arbitrary = pltpu.CompilerParams(
        dimension_semantics=("arbitrary",), vmem_limit_bytes=32 * 1024 * 1024)

    # Pass 1: un-normalized gains per tile (no jnp.pad of x; mask in kernel).
    gains = pl.pallas_call(
        functools.partial(_leaf_gain_kernel, batch=batch, tile_b=tile_b),
        out_shape=jax.ShapeDtypeStruct((padded, n_beam), jnp.float32),
        grid=(n_tiles,),
        in_specs=[
            pl.BlockSpec((tile_b, two_na), lambda i: (i, 0)),
            pl.BlockSpec((two_na, 2 * n_beam), lambda i: (0, 0)),
            pl.BlockSpec((2 * n_beam, n_beam), lambda i: (0, 0)),
        ],
        out_specs=pl.BlockSpec((tile_b, n_beam), lambda i: (i, 0)),
        compiler_params=cp_parallel,
    )(x, w, s)

    # Pass 2: global scalar sum (tiny accumulator output).
    total = pl.pallas_call(
        _leaf_sum_kernel,
        out_shape=jax.ShapeDtypeStruct((1, 1), jnp.float32),
        grid=(n_tiles,),
        in_specs=[pl.BlockSpec((tile_b, n_beam), lambda i: (i, 0))],
        out_specs=pl.BlockSpec((1, 1), lambda i: (0, 0)),
        compiler_params=cp_arbitrary,
    )(gains)

    # Pass 3: normalize per tile; rows >= batch of the last block are dropped.
    return pl.pallas_call(
        _leaf_normalize_kernel,
        out_shape=jax.ShapeDtypeStruct((batch, n_beam), jnp.float32),
        grid=(n_tiles,),
        in_specs=[
            pl.BlockSpec((1, 1), lambda i: (0, 0)),
            pl.BlockSpec((tile_b, n_beam), lambda i: (i, 0)),
        ],
        out_specs=pl.BlockSpec((tile_b, n_beam), lambda i: (i, 0)),
        compiler_params=cp_parallel,
    )(total, gains)


def leaf_forward_ref(x, codebook_real, codebook_imag):
    """Pure-NumPy (float64) reference mirroring the PyTorch forward."""
    x = np.asarray(x, np.float64)
    cr = np.asarray(codebook_real, np.float64)
    ci = np.asarray(codebook_imag, np.float64)
    na = x.shape[1] // 2
    xr, xi = x[:, :na], x[:, na:]
    bf_r = xr @ cr.T - xi @ ci.T
    bf_i = xr @ ci.T + xi @ cr.T
    gain = bf_r ** 2 + bf_i ** 2
    return gain / gain.sum()


if __name__ == "__main__":
    # Deterministic codebook parameters (module __init__).
    azimuths = np.linspace(-np.pi / 2, np.pi / 2, N_BEAM)
    cb = _dft_codebook(N_ANTENNA, azimuths)
    cb_real = jnp.asarray(np.real(cb), dtype=jnp.float32)   # (N_BEAM, N_ANTENNA)
    cb_imag = jnp.asarray(np.imag(cb), dtype=jnp.float32)   # (N_BEAM, N_ANTENNA)

    key = jax.random.PRNGKey(0)
    k_small, k_big = jax.random.split(key)

    # Small-batch example: (batch=2, 2*n_antenna=128) -> grid-less path.
    x_small = jax.random.normal(k_small, (2, 2 * N_ANTENNA), dtype=jnp.float32)
    out_small = jax.block_until_ready(leaf_forward(x_small, cb_real, cb_imag))
    ref_small = leaf_forward_ref(x_small, cb_real, cb_imag)
    np.testing.assert_allclose(np.asarray(out_small), ref_small,
                               rtol=1e-4, atol=1e-6)

    # Force the batch-tiled path (non-divisible batch exercises in-kernel masking).
    x_big = jax.random.normal(k_big, (300, 2 * N_ANTENNA), dtype=jnp.float32)
    out_big = jax.block_until_ready(
        leaf_forward(x_big, cb_real, cb_imag, tile_b=128, small_batch_max=0))
    ref_big = leaf_forward_ref(x_big, cb_real, cb_imag)
    np.testing.assert_allclose(np.asarray(out_big), ref_big,
                               rtol=1e-4, atol=1e-6)

    print("KERNEL_OK")
</pallas_src>

<mosaic_0001>
module attributes {stable_mosaic.version = 11 : i64} {
  func.func @_leaf_kernel_small(%arg0: memref<2x128xf32, #tpu.memory_space<vmem>>, %arg1: memref<128x16xf32, #tpu.memory_space<vmem>>, %arg2: memref<16x8xf32, #tpu.memory_space<vmem>>, %arg3: memref<2x8xf32, #tpu.memory_space<vmem>>) attributes {dimension_semantics = [], scalar_prefetch = 0 : i64, scratch_operands = 0 : i64, tpu.core_type = #tpu.core_type<tc>} {
    %c0 = arith.constant 0 : index
    %c0_0 = arith.constant 0 : index
    %0 = vector.load %arg0[%c0, %c0_0] : memref<2x128xf32, #tpu.memory_space<vmem>>, vector<2x128xf32>
    %c0_1 = arith.constant 0 : index
    %c0_2 = arith.constant 0 : index
    %1 = vector.load %arg1[%c0_1, %c0_2] : memref<128x16xf32, #tpu.memory_space<vmem>>, vector<128x16xf32>
    %cst = arith.constant dense<0.000000e+00> : vector<2x16xf32>
    %2 = tpu.matmul %0, %1, %cst {dimension_numbers = #tpu.dot_dimension_numbers<[1], [0], [0], [1], [0, 0, 1, 1], [], []>} : vector<2x128xf32>, vector<128x16xf32>, vector<2x16xf32> -> vector<2x16xf32>
    %3 = arith.mulf %2, %2 : vector<2x16xf32>
    %c0_3 = arith.constant 0 : index
    %c0_4 = arith.constant 0 : index
    %4 = vector.load %arg2[%c0_3, %c0_4] : memref<16x8xf32, #tpu.memory_space<vmem>>, vector<16x8xf32>
    %cst_5 = arith.constant dense<0.000000e+00> : vector<2x8xf32>
    %5 = tpu.matmul %3, %4, %cst_5 {dimension_numbers = #tpu.dot_dimension_numbers<[1], [0], [0], [1], [0, 0, 1, 1], [], []>} : vector<2x16xf32>, vector<16x8xf32>, vector<2x8xf32> -> vector<2x8xf32>
    %6 = vector.shape_cast %5 : vector<2x8xf32> to vector<1x2x8xf32>
    %cst_6 = arith.constant dense<0.000000e+00> : vector<1xf32>
    %7 = vector.multi_reduction <add>, %6, %cst_6 [1, 2] : vector<1x2x8xf32> to vector<1xf32>
    %8 = vector.shape_cast %7 : vector<1xf32> to vector<1x1x1xf32>
    %9 = vector.extract %8[0, 0, 0] : f32 from vector<1x1x1xf32>
    %10 = vector.broadcast %9 : f32 to vector<1x1xf32>
    %11 = tpu.reciprocal %10 {approx = true} : vector<1x1xf32> -> vector<1x1xf32>
    %12 = arith.mulf %10, %11 : vector<1x1xf32>
    %cst_7 = arith.constant 2.000000e+00 : f32
    %13 = vector.broadcast %cst_7 : f32 to vector<1x1xf32>
    %14 = arith.subf %13, %12 : vector<1x1xf32>
    %15 = arith.mulf %11, %14 : vector<1x1xf32>
    %16 = vector.broadcast %15 : vector<1x1xf32> to vector<2x8xf32>
    %17 = arith.mulf %5, %16 : vector<2x8xf32>
    %c0_8 = arith.constant 0 : index
    %c0_9 = arith.constant 0 : index
    %18 = vector.load %arg3[%c0_8, %c0_9] : memref<2x8xf32, #tpu.memory_space<vmem>>, vector<2x8xf32>
    tpu.vector_store %arg3[%c0_8, %c0_9], %17 {strides = array<i32>} : memref<2x8xf32, #tpu.memory_space<vmem>>, vector<2x8xf32>,
    return
  }
}

</mosaic_0001>

<llo_original>
// kernel: tpu_custom_call.1
$region0: #{tpu_custom_call.1}
  #allocation0 [shape = 'u32[]', space=smem, size = 0x4, offset = 0x4, fixed_abs, tag = 'smem constant byte address 0x4 - core index']
  #allocation1 [shape = 'u32[144,128]{1,0:T(1,128)}', space=vmem, size = 0x12000, scoped, tag = 'internal scratch']
  %s0 = inlined_call_operand.vmem [shape: f32[2,128], index: 0, kind: input, shape index: {}]
  %s1 = inlined_call_operand.vmem [shape: f32[128,16], index: 1, kind: input, shape index: {}]
  %s2 = inlined_call_operand.vmem [shape: f32[16,8], index: 2, kind: input, shape index: {}]
  %s3 = inlined_call_operand.hbm [shape: f32[2,8], index: 3, kind: output, shape index: {}]
  %s4 = sld [smem:[#allocation0]]
  $region22: #{tpu_custom_call.1} parent=0
    _
  %s6 = ssub.s32 1, %s4
  %s7 = scalar_select 0, %s6, %s4
  $region1: #{tpu_custom_call.1} parent=0
    #allocation2 [shape = 'u8[1024]{0}', space=vmem, size = 0x400, scoped, tag = 'output window, operand 0, single buffered']
    #allocation3 [shape = 's32[1]{0}', space=sflag, size = 0x4, scoped, tag = 'scoped memory for tpu_custom_call.1']
    %8 = vsyncpa [#allocation3], 0
    // Predicated region
    $region2: #{tpu_custom_call.1} parent=1 // pred_check
      _
    $region3: #{tpu_custom_call.1} parent=1 // pred_check_branch
      %10 = sbr.rel (0) target = $region5
    $region4: #{tpu_custom_call.1} parent=1 // pred_region
      _
    $region5: #{tpu_custom_call.1} parent=1 // pred_fallthru
      _
    // Predicated region
    $region6: #{tpu_custom_call.1} parent=1 // pred_check
      _
    $region7: #{tpu_custom_call.1} parent=1 // pred_check_branch
      %12 = sbr.rel (0) target = $region9
    $region8: #{tpu_custom_call.1} parent=1 // pred_region
      _
    $region9: #{tpu_custom_call.1} parent=1 // pred_fallthru
      _
    // Predicated region
    $region10: #{tpu_custom_call.1} parent=1 // pred_check
      _
    $region11: #{tpu_custom_call.1} parent=1 // pred_check_branch
      %14 = sbr.rel (0) target = $region13
    $region12: #{tpu_custom_call.1} parent=1 // pred_region
      _
    $region13: #{tpu_custom_call.1} parent=1 // pred_fallthru
      _
    %v15 = vld [vmem:[%s0] sm:$0x3]
    %v16 = vld [vmem:[%s1] sm:$0xff]
    %v17 = vld [vmem:[%s1 + $0x8] sm:$0xff]
    %v18 = vld [vmem:[%s1 + $0x10] sm:$0xff]
    %v19 = vld [vmem:[%s1 + $0x18] sm:$0xff]
    %v20 = vld [vmem:[%s1 + $0x20] sm:$0xff]
    %v21 = vld [vmem:[%s1 + $0x28] sm:$0xff]
    %v22 = vld [vmem:[%s1 + $0x30] sm:$0xff]
    %v23 = vld [vmem:[%s1 + $0x38] sm:$0xff]
    %v24 = vld [vmem:[%s1 + $0x40] sm:$0xff]
    %v25 = vld [vmem:[%s1 + $0x48] sm:$0xff]
    %v26 = vld [vmem:[%s1 + $0x50] sm:$0xff]
    %v27 = vld [vmem:[%s1 + $0x58] sm:$0xff]
    %v28 = vld [vmem:[%s1 + $0x60] sm:$0xff]
    %v29 = vld [vmem:[%s1 + $0x68] sm:$0xff]
    %v30 = vld [vmem:[%s1 + $0x70] sm:$0xff]
    %v31 = vld [vmem:[%s1 + $0x78] sm:$0xff]
    %32 = vmatprep.subr.mxu0 0.0
    %33 = vmatpush1.msra.mxu0 %v16
    %34 = vmatprep.subr.mxu0 0.0
    %35 = vmatpush1.msra.mxu0 %v17
    %36 = vmatprep.subr.mxu0 0.0
    %37 = vmatpush1.msra.mxu0 %v18
    %38 = vmatprep.subr.mxu0 0.0
    %39 = vmatpush1.msra.mxu0 %v19
    %40 = vmatprep.subr.mxu0 0.0
    %41 = vmatpush1.msra.mxu0 %v20
    %42 = vmatprep.subr.mxu0 0.0
    %43 = vmatpush1.msra.mxu0 %v21
    %44 = vmatprep.subr.mxu0 0.0
    %45 = vmatpush1.msra.mxu0 %v22
    %46 = vmatprep.subr.mxu0 0.0
    %47 = vmatpush1.msra.mxu0 %v23
    %48 = vmatprep.subr.mxu0 0.0
    %49 = vmatpush1.msra.mxu0 %v24
    %50 = vmatprep.subr.mxu0 0.0
    %51 = vmatpush1.msra.mxu0 %v25
    %52 = vmatprep.subr.mxu0 0.0
    %53 = vmatpush1.msra.mxu0 %v26
    %54 = vmatprep.subr.mxu0 0.0
    %55 = vmatpush1.msra.mxu0 %v27
    %56 = vmatprep.subr.mxu0 0.0
    %57 = vmatpush1.msra.mxu0 %v28
    %58 = vmatprep.subr.mxu0 0.0
    %59 = vmatpush1.msra.mxu0 %v29
    %60 = vmatprep.subr.mxu0 0.0
    %61 = vmatpush1.msra.mxu0 %v30
    %62 = vmatprep.subr.mxu0 0.0
    %63 = vmatpush1.msra.mxu0 %v31
    %64 = vmatprep.subr.mxu0 0.0
    %65 = vmatpush1.msra.mxu0 0.0
    %66 = vmatprep.subr.mxu0 0.0
    %67 = vmatpush1.msra.mxu0 0.0
    %68 = vmatprep.subr.mxu0 0.0
    %69 = vmatpush1.msra.mxu0 0.0
    %70 = vmatprep.subr.mxu0 0.0
    %71 = vmatpush1.msra.mxu0 0.0
    %72 = vmatprep.subr.mxu0 0.0
    %73 = vmatpush1.msra.mxu0 0.0
    %74 = vmatprep.subr.mxu0 0.0
    %75 = vmatpush1.msra.mxu0 0.0
    %76 = vmatprep.subr.mxu0 0.0
    %77 = vmatpush1.msra.mxu0 0.0
    %78 = vmatprep.subr.mxu0 0.0
    %79 = vmatpush1.msra.mxu0 0.0
    %80 = vmatprep.subr.mxu0 0.0
    %81 = vmatpush1.msra.mxu0 0.0
    %82 = vmatprep.subr.mxu0 0.0
    %83 = vmatpush1.msra.mxu0 0.0
    %84 = vmatprep.subr.mxu0 0.0
    %85 = vmatpush1.msra.mxu0 0.0
    %86 = vmatprep.subr.mxu0 0.0
    %87 = vmatpush1.msra.mxu0 0.0
    %88 = vmatprep.subr.mxu0 0.0
    %89 = vmatpush1.msra.mxu0 0.0
    %90 = vmatprep.subr.mxu0 0.0
    %91 = vmatpush1.msra.mxu0 0.0
    %92 = vmatprep.subr.mxu0 0.0
    %93 = vmatpush1.msra.mxu0 0.0
    %94 = vmatprep.subr.mxu0 0.0
    %95 = vmatpush1.msra.mxu0 0.0
    %96 = vmatprep.mubr.f32.mxu0 0.0
    %97 = vmatmul.mubr.f32.gmra.mrb[0].mxu0 %v15
    %v98 = vpop.f32.mrb[0].mxu0
    %v99 = vadd.f32 0.0, %v98
    %v100 = vpop.f32.mrb[0].mxu0
    %101 = vdwg.mxu0
    %v102 = vmul.f32 %v99, %v99
    %v103 = vld [vmem:[%s2] sm:$0xff]
    %v104 = vld [vmem:[%s2 + $0x8] sm:$0xff]
    %vm105 = vcmask 130048
    %v107 = vsel %vm105, %v102, 0
    %109 = vmatprep.subr.mxu0 0.0
    %110 = vmatpush1.msra.mxu0 %v103
    %111 = vmatprep.subr.mxu0 0.0
    %112 = vmatpush1.msra.mxu0 %v104
    %113 = vmatprep.subr.mxu0 0.0
    %114 = vmatpush1.msra.mxu0 0.0
    %115 = vmatprep.subr.mxu0 0.0
    %116 = vmatpush1.msra.mxu0 0.0
    %117 = vmatprep.subr.mxu0 0.0
    %118 = vmatpush1.msra.mxu0 0.0
    %119 = vmatprep.subr.mxu0 0.0
    %120 = vmatpush1.msra.mxu0 0.0
    %121 = vmatprep.subr.mxu0 0.0
    %122 = vmatpush1.msra.mxu0 0.0
    %123 = vmatprep.subr.mxu0 0.0
    %124 = vmatpush1.msra.mxu0 0.0
    %125 = vmatprep.subr.mxu0 0.0
    %126 = vmatpush1.msra.mxu0 0.0
    %127 = vmatprep.subr.mxu0 0.0
    %128 = vmatpush1.msra.mxu0 0.0
    %129 = vmatprep.subr.mxu0 0.0
    %130 = vmatpush1.msra.mxu0 0.0
    %131 = vmatprep.subr.mxu0 0.0
    %132 = vmatpush1.msra.mxu0 0.0
    %133 = vmatprep.subr.mxu0 0.0
    %134 = vmatpush1.msra.mxu0 0.0
    %135 = vmatprep.subr.mxu0 0.0
    %136 = vmatpush1.msra.mxu0 0.0
    %137 = vmatprep.subr.mxu0 0.0
    %138 = vmatpush1.msra.mxu0 0.0
    %139 = vmatprep.subr.mxu0 0.0
    %140 = vmatpush1.msra.mxu0 0.0
    %141 = vmatprep.subr.mxu0 0.0
    %142 = vmatpush1.msra.mxu0 0.0
    %143 = vmatprep.subr.mxu0 0.0
    %144 = vmatpush1.msra.mxu0 0.0
    %145 = vmatprep.subr.mxu0 0.0
    %146 = vmatpush1.msra.mxu0 0.0
    %147 = vmatprep.subr.mxu0 0.0
    %148 = vmatpush1.msra.mxu0 0.0
    %149 = vmatprep.subr.mxu0 0.0
    %150 = vmatpush1.msra.mxu0 0.0
    %151 = vmatprep.subr.mxu0 0.0
    %152 = vmatpush1.msra.mxu0 0.0
    %153 = vmatprep.subr.mxu0 0.0
    %154 = vmatpush1.msra.mxu0 0.0
    %155 = vmatprep.subr.mxu0 0.0
    %156 = vmatpush1.msra.mxu0 0.0
    %157 = vmatprep.subr.mxu0 0.0
    %158 = vmatpush1.msra.mxu0 0.0
    %159 = vmatprep.subr.mxu0 0.0
    %160 = vmatpush1.msra.mxu0 0.0
    %161 = vmatprep.subr.mxu0 0.0
    %162 = vmatpush1.msra.mxu0 0.0
    %163 = vmatprep.subr.mxu0 0.0
    %164 = vmatpush1.msra.mxu0 0.0
    %165 = vmatprep.subr.mxu0 0.0
    %166 = vmatpush1.msra.mxu0 0.0
    %167 = vmatprep.subr.mxu0 0.0
    %168 = vmatpush1.msra.mxu0 0.0
    %169 = vmatprep.subr.mxu0 0.0
    %170 = vmatpush1.msra.mxu0 0.0
    %171 = vmatprep.subr.mxu0 0.0
    %172 = vmatpush1.msra.mxu0 0.0
    %173 = vmatprep.mubr.f32.mxu0 0.0
    %174 = vmatmul.mubr.f32.gmra.mrb[0].mxu0 %v107
    %v175 = vpop.f32.mrb[0].mxu0
    %v176 = vadd.f32 0.0, %v175
    %v177 = vpop.f32.mrb[0].mxu0
    %178 = vdwg.mxu0
    %vm179 = vcmask 58368
    %v180 = vsel %vm179, %v176, 0.0
    %181 = vadd.xlane.f32.xlu0 %v180
    %v182 = vpop.xlane.xlu0 %181
    %v183 = vrot.slane %v182, 4
    %v184 = vadd.f32 %v182, %v183
    %v185 = vrot.slane %v184, 2
    %v186 = vadd.f32 %v184, %v185
    %v187 = vrot.slane %v186, 1
    %v188 = vadd.f32 %v186, %v187
    %s189 = vtos %v188
    %v190 = vstv %s189
    %v191 = vrcp.pop %v190
    %v192 = vmul.f32 %v190, %v191
    %v193 = vsub.f32 2.0, %v192
    %v194 = vmul.f32 %v191, %v193
    %v195 = vmul.f32 %v176, %v194
    %196 = vst.msk [vmem:[#allocation2] sm:$0x3] %vm179, %v195
    // Predicated region
    $region14: #{tpu_custom_call.1} parent=1 // pred_check
      _
    $region15: #{tpu_custom_call.1} parent=1 // pred_check_branch
      %198 = sbr.rel (0) target = $region17
    $region16: #{tpu_custom_call.1} parent=1 // pred_region
      %s200 = ssub.s32 32, 32
      %201 = vsyncadd [#allocation3], %s200
      %s203 = sshll.u32 [#allocation2], 4
      %s204 = int_to_ptr.vmem [resolvable:$true] %s203
      %206 = dma.vmem_to_hbm [thread:$0]  %s204, 32, %s3, [#allocation3]
    $region17: #{tpu_custom_call.1} parent=1 // pred_fallthru
      _
    // Predicated region
    $region18: #{tpu_custom_call.1} parent=1 // pred_check
      _
    $region19: #{tpu_custom_call.1} parent=1 // pred_check_branch
      %208 = sbr.rel (0) target = $region21
    $region20: #{tpu_custom_call.1} parent=1 // pred_region
      %209 = dma.done [#allocation3], 32
    $region21: #{tpu_custom_call.1} parent=1 // pred_fallthru
      _
    %210 = vsyncpa [#allocation3], 1

</llo_original>
